<compile_context>
chip_gen: v7x
topology: tpu7x:2x2x1
jax: 0.10.0
libtpu: 0.0.40
codegen_flags: <defaults>
</compile_context>

<pallas_src>
import functools

import jax
import jax.numpy as jnp
from jax import lax
from jax.experimental import pallas as pl
from jax.experimental.pallas import tpu as pltpu


def _ls_ce_kernel(logits_ref, target_ref, out_ref, *, eps, num_classes, n_rows, tm):
    i = pl.program_id(0)

    x = logits_ref[...].astype(jnp.float32)          # (TM, C)
    tgt = target_ref[...]                            # (TM, 1) int32

    # Numerically stable logsumexp pieces (only (TM, 1) row-statistics kept live).
    m = jnp.max(x, axis=-1, keepdims=True)                              # (TM, 1)
    lse = jnp.log(jnp.sum(jnp.exp(x - m), axis=-1, keepdims=True))      # (TM, 1)

    off = jnp.float32(eps / (num_classes - 1))
    on = jnp.float32(1.0 - eps)

    # Fused weighted reduction: sum_j d_j * x_j in a single pass over the tile.
    # (Out-of-range target ids simply select no "on" weight, unlike PyTorch which
    #  would error — acceptable divergence for well-formed inputs.)
    class_ids = lax.broadcasted_iota(jnp.int32, x.shape, dimension=1)   # (TM, C)
    w = jnp.where(class_ids == tgt, on, off)                            # (TM, C)
    weighted = jnp.sum(w * x, axis=-1, keepdims=True)                   # (TM, 1)

    # target_dist sums to exactly 1, hence per-row loss:
    per_row = (m + lse) - weighted                                      # (TM, 1)

    if n_rows % tm == 0:
        # All tiles are full: no masking needed anywhere.
        out_ref[...] = jnp.sum(per_row).reshape(1, 1, 1)
    else:
        is_last = i == pl.num_programs(0) - 1

        @pl.when(jnp.logical_not(is_last))
        def _full_tile():
            out_ref[...] = jnp.sum(per_row).reshape(1, 1, 1)

        @pl.when(is_last)
        def _remainder_tile():
            # Mask padded rows so undefined data (possibly NaN/Inf) from the
            # partially-read last block does not contribute; jnp.where does not
            # propagate NaN from the unselected branch.
            row_ids = i * tm + lax.broadcasted_iota(jnp.int32, per_row.shape, 0)
            masked = jnp.where(row_ids < n_rows, per_row, 0.0)
            out_ref[...] = jnp.sum(masked).reshape(1, 1, 1)


def _round_up(x, m):
    return ((x + m - 1) // m) * m


def _vmem_capacity_bytes():
    """Physical VMEM on this generation; conservative fallback if unqueryable."""
    try:
        info = pltpu.get_tpu_info()
        cap = getattr(info, "vmem_capacity_bytes", None)
        if cap:
            return int(cap)
    except Exception:
        pass
    return 64 * 2**20  # v7x-sized fallback (safe everywhere)


def _choose_tm(n, c, itemsize, *, vmem_cap):
    """Largest multiple-of-8 row tile whose double-buffered logits block fits budget.

    Generation-aware: ~56 MiB on 128 MiB-VMEM parts (v5e/v6e), ~24 MiB on 64 MiB
    v7x, so big tiles amortize the ~0.35 us/step overhead without risking OOM.
    """
    budget = max(16 * 2**20, min(vmem_cap // 2 - 8 * 2**20, 56 * 2**20))
    max_tm_by_vmem = max(8, (budget // (2 * c * itemsize)) // 8 * 8)
    return int(min(8192, _round_up(n, 8), max_tm_by_vmem))


def label_smoothed_cross_entropy(logits, target, *, eps=0.1, block_rows=None):
    """logits: (N, C) float (f32 or bf16); target: (N,) int. Returns scalar f32 loss."""
    n, c = logits.shape
    if c < 2:
        raise ValueError("num_classes must be >= 2 for label smoothing (eps/(C-1)).")

    target2d = target.astype(jnp.int32).reshape(n, 1)
    itemsize = jnp.dtype(logits.dtype).itemsize
    vmem_cap = _vmem_capacity_bytes()

    tm = int(block_rows) if block_rows is not None else _choose_tm(
        n, c, itemsize, vmem_cap=vmem_cap)
    tm = max(8, (tm // 8) * 8)
    num_tiles = pl.cdiv(n, tm)

    kernel = functools.partial(
        _ls_ce_kernel, eps=float(eps), num_classes=int(c), n_rows=int(n), tm=int(tm)
    )

    # VMEM needed: double-buffered logits + (lane-padded) targets blocks + tiny output.
    needed = 2 * tm * c * itemsize + 2 * tm * 128 * 4 + 2 * 128 * 4
    vmem_limit = int(max(32 * 2**20, min(vmem_cap - 16 * 2**20, needed + 8 * 2**20)))

    cost = pl.CostEstimate(
        flops=int(7 * n * c),
        transcendentals=int(n * c),
        bytes_accessed=int(n * c * itemsize + n * 4 + num_tiles * 4),
    )

    partials = pl.pallas_call(
        kernel,
        out_shape=jax.ShapeDtypeStruct((num_tiles, 1, 1), jnp.float32),
        grid_spec=pltpu.PrefetchScalarGridSpec(
            num_scalar_prefetch=0,
            grid=(num_tiles,),
            in_specs=[
                pl.BlockSpec((tm, c), lambda i: (i, 0)),
                pl.BlockSpec((tm, 1), lambda i: (i, 0)),
            ],
            out_specs=pl.BlockSpec((1, 1, 1), lambda i: (i, 0, 0)),
        ),
        compiler_params=pltpu.CompilerParams(
            dimension_semantics=("parallel",),
            vmem_limit_bytes=vmem_limit,
        ),
        cost_estimate=cost,
    )(logits, target2d)

    # Final reduction over per-tile partial sums + mean over rows (cheap, in XLA).
    return jnp.sum(partials) * (1.0 / n)


def _reference(logits, target, eps):
    """Pure-JAX reference mirroring the PyTorch module."""
    logits = logits.astype(jnp.float32)
    n, c = logits.shape
    logp = jax.nn.log_softmax(logits, axis=-1)
    dist = jnp.full((n, c), eps / (c - 1), dtype=jnp.float32)
    dist = dist.at[jnp.arange(n), target].set(1.0 - eps)
    return jnp.mean(jnp.sum(-dist * logp, axis=-1))


if __name__ == "__main__":
    key = jax.random.PRNGKey(0)
    EPS = 0.1  # cfg.MODEL.LABEL_SMOOTHING_EPS

    # Case 1: multi-tile grid with a remainder tile (N=20 not divisible by TM=8),
    # exercising per-tile partial outputs and the masked last-tile path.
    k1, k2, k3, k4 = jax.random.split(key, 4)
    N1, C1 = 20, 32
    logits1 = jax.random.normal(k1, (N1, C1), dtype=jnp.float32)
    target1 = jax.random.randint(k2, (N1,), 0, C1, dtype=jnp.int32)
    loss1 = jax.block_until_ready(
        label_smoothed_cross_entropy(logits1, target1, eps=EPS, block_rows=8)
    )
    ref1 = _reference(logits1, target1, EPS)
    assert jnp.allclose(loss1, ref1, atol=1e-5, rtol=1e-5), (loss1, ref1)

    # Case 2: small shape with auto (generation-aware) tile selection, single tile.
    N2, C2 = 8, 16
    logits2 = jax.random.normal(k3, (N2, C2), dtype=jnp.float32)
    target2 = jax.random.randint(k4, (N2,), 0, C2, dtype=jnp.int32)
    loss2 = jax.block_until_ready(label_smoothed_cross_entropy(logits2, target2, eps=EPS))
    ref2 = _reference(logits2, target2, EPS)
    assert jnp.allclose(loss2, ref2, atol=1e-5, rtol=1e-5), (loss2, ref2)

    print("KERNEL_OK")
</pallas_src>

<mosaic_0001>
module attributes {stable_mosaic.version = 11 : i64} {
  func.func @_ls_ce_kernel(%arg0: i32, %arg1: memref<8x32xf32, #tpu.memory_space<vmem>>, %arg2: memref<8x1xi32, #tpu.memory_space<vmem>>, %arg3: memref<1x1x1xf32, #tpu.memory_space<vmem>>) attributes {dimension_semantics = [#tpu.dimension_semantics<parallel>], iteration_bounds = array<i64: 3>, scalar_prefetch = 0 : i64, scratch_operands = 0 : i64, tpu.core_type = #tpu.core_type<tc>, window_params = [{transform_indices = @transform_0, window_bounds = array<i64: 8, 32>}, {transform_indices = @transform_1, window_bounds = array<i64: 8, 1>}, {transform_indices = @transform_2, window_bounds = array<i64: 1, 1, 1>}]} {
    %c0 = arith.constant 0 : index
    %c0_0 = arith.constant 0 : index
    %0 = vector.load %arg1[%c0, %c0_0] : memref<8x32xf32, #tpu.memory_space<vmem>>, vector<8x32xf32>
    %c0_1 = arith.constant 0 : index
    %c0_2 = arith.constant 0 : index
    %1 = vector.load %arg2[%c0_1, %c0_2] : memref<8x1xi32, #tpu.memory_space<vmem>>, vector<8x1xi32>
    %cst = arith.constant dense<0xFF800000> : vector<8xf32>
    %2 = vector.multi_reduction <maximumf>, %0, %cst [1] : vector<8x32xf32> to vector<8xf32>
    %3 = vector.shape_cast %2 : vector<8xf32> to vector<8x1xf32>
    %4 = vector.broadcast %3 : vector<8x1xf32> to vector<8x32xf32>
    %5 = arith.subf %0, %4 : vector<8x32xf32>
    %6 = math.exp %5 : vector<8x32xf32>
    %cst_3 = arith.constant dense<0.000000e+00> : vector<8xf32>
    %7 = vector.multi_reduction <add>, %6, %cst_3 [1] : vector<8x32xf32> to vector<8xf32>
    %8 = vector.shape_cast %7 : vector<8xf32> to vector<8x1xf32>
    %9 = math.log %8 : vector<8x1xf32>
    %10 = tpu.iota {dimensions = array<i32: 1>} : vector<8x32xi32>
    %11 = vector.broadcast %1 : vector<8x1xi32> to vector<8x32xi32>
    %12 = arith.cmpi eq, %10, %11 : vector<8x32xi32>
    %cst_4 = arith.constant 0.899999976 : f32
    %cst_5 = arith.constant 0.0032258064 : f32
    %13 = vector.broadcast %cst_4 : f32 to vector<8x32xf32>
    %14 = vector.broadcast %cst_5 : f32 to vector<8x32xf32>
    %15 = arith.select %12, %13, %14 : vector<8x32xi1>, vector<8x32xf32>
    %16 = arith.mulf %15, %0 : vector<8x32xf32>
    %cst_6 = arith.constant dense<0.000000e+00> : vector<8xf32>
    %17 = vector.multi_reduction <add>, %16, %cst_6 [1] : vector<8x32xf32> to vector<8xf32>
    %18 = vector.shape_cast %17 : vector<8xf32> to vector<8x1xf32>
    %19 = arith.addf %3, %9 : vector<8x1xf32>
    %20 = arith.subf %19, %18 : vector<8x1xf32>
    %c2_i32 = arith.constant 2 : i32
    %21 = arith.cmpi eq, %arg0, %c2_i32 : i32
    %true = arith.constant true
    %22 = arith.xori %21, %true : i1
    %23 = arith.extui %22 : i1 to i32
    %c0_i32 = arith.constant 0 : i32
    %24 = arith.cmpi ne, %23, %c0_i32 : i32
    scf.if %24 {
      %27 = vector.shape_cast %20 : vector<8x1xf32> to vector<1x8x1xf32>
      %cst_8 = arith.constant dense<0.000000e+00> : vector<1xf32>
      %28 = vector.multi_reduction <add>, %27, %cst_8 [1, 2] : vector<1x8x1xf32> to vector<1xf32>
      %29 = vector.shape_cast %28 : vector<1xf32> to vector<1x1x1xf32>
      %30 = vector.extract %29[0, 0, 0] : f32 from vector<1x1x1xf32>
      %31 = vector.broadcast %30 : f32 to vector<1x1x1xf32>
      %c0_9 = arith.constant 0 : index
      %c0_10 = arith.constant 0 : index
      %c0_11 = arith.constant 0 : index
      %32 = vector.load %arg3[%c0_9, %c0_10, %c0_11] : memref<1x1x1xf32, #tpu.memory_space<vmem>>, vector<1x1x1xf32>
      tpu.vector_store %arg3[%c0_9, %c0_10, %c0_11], %31 {strides = array<i32>} : memref<1x1x1xf32, #tpu.memory_space<vmem>>, vector<1x1x1xf32>,
    } else {
    }
    %25 = arith.extui %21 : i1 to i32
    %c0_i32_7 = arith.constant 0 : i32
    %26 = arith.cmpi ne, %25, %c0_i32_7 : i32
    scf.if %26 {
      %c8_i32 = arith.constant 8 : i32
      %27 = arith.muli %arg0, %c8_i32 : i32
      %28 = tpu.iota {dimensions = array<i32: 0>} : vector<8x1xi32>
      %29 = vector.broadcast %27 : i32 to vector<8x1xi32>
      %30 = arith.addi %29, %28 : vector<8x1xi32>
      %c20_i32 = arith.constant 20 : i32
      %31 = vector.broadcast %c20_i32 : i32 to vector<8x1xi32>
      %32 = arith.cmpi slt, %30, %31 : vector<8x1xi32>
      %cst_8 = arith.constant 0.000000e+00 : f32
      %33 = vector.broadcast %cst_8 : f32 to vector<8x1xf32>
      %34 = arith.select %32, %20, %33 : vector<8x1xi1>, vector<8x1xf32>
      %35 = vector.shape_cast %34 : vector<8x1xf32> to vector<1x8x1xf32>
      %cst_9 = arith.constant dense<0.000000e+00> : vector<1xf32>
      %36 = vector.multi_reduction <add>, %35, %cst_9 [1, 2] : vector<1x8x1xf32> to vector<1xf32>
      %37 = vector.shape_cast %36 : vector<1xf32> to vector<1x1x1xf32>
      %38 = vector.extract %37[0, 0, 0] : f32 from vector<1x1x1xf32>
      %39 = vector.broadcast %38 : f32 to vector<1x1x1xf32>
      %c0_10 = arith.constant 0 : index
      %c0_11 = arith.constant 0 : index
      %c0_12 = arith.constant 0 : index
      %40 = vector.load %arg3[%c0_10, %c0_11, %c0_12] : memref<1x1x1xf32, #tpu.memory_space<vmem>>, vector<1x1x1xf32>
      tpu.vector_store %arg3[%c0_10, %c0_11, %c0_12], %39 {strides = array<i32>} : memref<1x1x1xf32, #tpu.memory_space<vmem>>, vector<1x1x1xf32>,
    } else {
    }
    return
  }
  func.func @transform_0(%arg0: i32) -> (i32, i32) {
    %c0_i32 = arith.constant 0 : i32
    %c0_i32_0 = arith.constant 0 : i32
    return %arg0, %c0_i32 : i32, i32
  }
  func.func @transform_1(%arg0: i32) -> (i32, i32) {
    %c0_i32 = arith.constant 0 : i32
    %c0_i32_0 = arith.constant 0 : i32
    return %arg0, %c0_i32 : i32, i32
  }
  func.func @transform_2(%arg0: i32) -> (i32, i32, i32) {
    %c0_i32 = arith.constant 0 : i32
    %c0_i32_0 = arith.constant 0 : i32
    %c0_i32_1 = arith.constant 0 : i32
    return %arg0, %c0_i32, %c0_i32_0 : i32, i32, i32
  }
}

</mosaic_0001>

<llo_original>
// kernel: tpu_custom_call.1
$region0: #{tpu_custom_call.1}
  #allocation0 [shape = 'u32[]', space=smem, size = 0x4, offset = 0x4, fixed_abs, tag = 'smem constant byte address 0x4 - core index']
  #allocation1 [shape = 'u32[144,128]{1,0:T(1,128)}', space=vmem, size = 0x12000, scoped, tag = 'internal scratch']
  %s0 = inlined_call_operand.vmem [shape: f32[20,32], index: 0, kind: input, shape index: {}]
  %s1 = inlined_call_operand.vmem [shape: s32[20,1], index: 1, kind: input, shape index: {}]
  %s2 = inlined_call_operand.vmem [shape: f32[3,1,1], index: 2, kind: output, shape index: {}]
  %s3 = sld [smem:[#allocation0]]
  $region49: #{tpu_custom_call.1} parent=0
    _
  %s5 = ssub.s32 1, %s3
  %s6 = scalar_select 0, %s5, %s3
  loop: start=0, step=1, limit=5
  $region2: #{tpu_custom_call.1} parent=0 // loop_pre_header
    _
  $region3: #{tpu_custom_call.1} parent=0 // loop_header
    %s8 = sphi 0, %s12
    %p9 = scmp.ge.s32.totalorder %s8, 5
    %s18 = sphi 0, %s20
    %s21 = sphi 0, %s18
    %s22 = sphi 0, %s21
    %s38 = sphi 0, %s22
    %s44 = sphi 0, %s46
    %s47 = sphi 0, %s44
    %s48 = sphi 0, %s47
    %s64 = sphi 0, %s48
    %s70 = sphi 0, %s72
    %s73 = sphi 0, %s70
    %s74 = sphi 0, %s73
    %s90 = sphi 0, %s74
  $region4: #{tpu_custom_call.1} parent=0 // loop_header_branch
    %11 = sbr.rel (%p9) target = $region8
  $region5: #{tpu_custom_call.1} parent=0 // loop_body
    %s13 = ssub.s32 %s8, 1
    %s14 = ssub.s32 %s8, 2
    %s15 = sadd.s32 %s8, 1
    %s16 = ssub.s32 %s8, %s15
    %p17 = scmp.eq.s32.totalorder %s16, 0
    %s19 = sadd.s32 %s18, 1
    %s20 = scalar_select %p17, %s18, %s19
    %p23 = pneg %p17
    %p24 = scmp.eq.s32.totalorder %s8, 2
    %p25 = por %p23, %p24
    %p26 = scmp.ne.s32.totalorder %s18, %s21
    %p27 = scmp.eq.s32.totalorder %s8, 0
    %p28 = por %p26, %p27
    %p29 = scmp.ne.s32.totalorder %s18, %s21
    %p30 = scmp.eq.s32.totalorder %s13, 2
    %p31 = por %p29, %p30
    %p32 = scmp.ne.s32.totalorder %s21, %s22
    %p33 = scmp.eq.s32.totalorder %s13, 0
    %p34 = por %p32, %p33
    %p35 = scmp.ne.s32.totalorder %s21, %s22
    %p36 = scmp.eq.s32.totalorder %s14, 2
    %p37 = por %p35, %p36
    %p39 = scmp.ne.s32.totalorder %s22, %s38
    %p40 = scmp.eq.s32.totalorder %s14, 0
    %p41 = por %p39, %p40
    %s42 = ssub.s32 %s8, %s15
    %p43 = scmp.eq.s32.totalorder %s42, 0
    %s45 = sadd.s32 %s44, 1
    %s46 = scalar_select %p43, %s44, %s45
    %p49 = pneg %p43
    %p50 = scmp.eq.s32.totalorder %s8, 2
    %p51 = por %p49, %p50
    %p52 = scmp.ne.s32.totalorder %s44, %s47
    %p53 = scmp.eq.s32.totalorder %s8, 0
    %p54 = por %p52, %p53
    %p55 = scmp.ne.s32.totalorder %s44, %s47
    %p56 = scmp.eq.s32.totalorder %s13, 2
    %p57 = por %p55, %p56
    %p58 = scmp.ne.s32.totalorder %s47, %s48
    %p59 = scmp.eq.s32.totalorder %s13, 0
    %p60 = por %p58, %p59
    %p61 = scmp.ne.s32.totalorder %s47, %s48
    %p62 = scmp.eq.s32.totalorder %s14, 2
    %p63 = por %p61, %p62
    %p65 = scmp.ne.s32.totalorder %s48, %s64
    %p66 = scmp.eq.s32.totalorder %s14, 0
    %p67 = por %p65, %p66
    %s68 = ssub.s32 %s8, %s15
    %p69 = scmp.eq.s32.totalorder %s68, 0
    %s71 = sadd.s32 %s70, 1
    %s72 = scalar_select %p69, %s70, %s71
    %p75 = pneg %p69
    %p76 = scmp.eq.s32.totalorder %s8, 2
    %p77 = por %p75, %p76
    %p78 = scmp.ne.s32.totalorder %s70, %s73
    %p79 = scmp.eq.s32.totalorder %s8, 0
    %p80 = por %p78, %p79
    %p81 = scmp.ne.s32.totalorder %s70, %s73
    %p82 = scmp.eq.s32.totalorder %s13, 2
    %p83 = por %p81, %p82
    %p84 = scmp.ne.s32.totalorder %s73, %s74
    %p85 = scmp.eq.s32.totalorder %s13, 0
    %p86 = por %p84, %p85
    %p87 = scmp.ne.s32.totalorder %s73, %s74
    %p88 = scmp.eq.s32.totalorder %s14, 2
    %p89 = por %p87, %p88
    %p91 = scmp.ne.s32.totalorder %s74, %s90
    %p92 = scmp.eq.s32.totalorder %s14, 0
    %p93 = por %p91, %p92
    %p94 = scmp.le.s32.totalorder 1, %s8
    %p95 = scmp.lt.s32.totalorder %s8, 4
    %p96 = pnand %p94, %p95
    %p97 = pneg %p96
    // Predicated region
    $region9: #{tpu_custom_call.1} parent=5 // pred_check
      _
    $region10: #{tpu_custom_call.1} parent=5 // pred_check_branch
      %99 = sbr.rel (%p96) target = $region12
    $region11: #{tpu_custom_call.1} parent=5 // pred_region
      %s100 = ssub.s32 %s8, 1
    $region12: #{tpu_custom_call.1} parent=5 // pred_fallthru
      _
    %p101 = scmp.lt.s32.totalorder %s8, 3
    // Predicated region
    $region13: #{tpu_custom_call.1} parent=5 // pred_check
      %p102 = pneg %p101
    $region14: #{tpu_custom_call.1} parent=5 // pred_check_branch
      %104 = sbr.rel (%p102) target = $region16
    $region15: #{tpu_custom_call.1} parent=5 // pred_region
      // Predicated region
      $region17: #{tpu_custom_call.1} parent=15 // pred_check
        %p105 = pneg %p28
      $region18: #{tpu_custom_call.1} parent=15 // pred_check_branch
        %107 = sbr.rel (%p105) target = $region20
      $region19: #{tpu_custom_call.1} parent=15 // pred_region
        %p108 = scmp.lt.s32.totalorder %s8, 2
        %s109 = scalar_select %p108, %s8, 2
        %s110 = smul.addr %s109, 8
        %s111 = scalar_lea.vmem %s0, %s110
      $region20: #{tpu_custom_call.1} parent=15 // pred_fallthru
        _
      // Predicated region
      $region21: #{tpu_custom_call.1} parent=15 // pred_check
        %p112 = pneg %p54
      $region22: #{tpu_custom_call.1} parent=15 // pred_check_branch
        %114 = sbr.rel (%p112) target = $region24
      $region23: #{tpu_custom_call.1} parent=15 // pred_region
        %p115 = scmp.lt.s32.totalorder %s8, 2
        %s116 = scalar_select %p115, %s8, 2
        %s117 = smul.addr %s116, 8
        %s118 = scalar_lea.vmem %s1, %s117
      $region24: #{tpu_custom_call.1} parent=15 // pred_fallthru
        _
    $region16: #{tpu_custom_call.1} parent=5 // pred_fallthru
      _
    %p119 = scmp.le.s32.totalorder 1, %s8
    %p120 = scmp.lt.s32.totalorder %s8, 4
    %p121 = pnand %p119, %p120
    %p122 = pneg %p121
    // Predicated region
    $region25: #{tpu_custom_call.1} parent=5 // pred_check
      _
    $region26: #{tpu_custom_call.1} parent=5 // pred_check_branch
      %124 = sbr.rel (%p121) target = $region28
    $region27: #{tpu_custom_call.1} parent=5 // pred_region
      %s125 = ssub.s32 %s8, 1
      %p126 = scmp.lt.s32.totalorder %s13, 2
      %s127 = scalar_select %p126, %s13, 2
      %s128 = smul.addr %s127, 8
      %s129 = scalar_lea.vmem %s0, %s128
      %p130 = pneg %p34
      %p131 = pneg %p31
      %p132 = scmp.lt.s32.totalorder %s13, 2
      %s133 = scalar_select %p132, %s13, 2
      %s134 = smul.addr %s133, 8
      %s135 = scalar_lea.vmem %s1, %s134
      %p136 = pneg %p60
      %p137 = pneg %p57
      %p138 = pneg %p86
      %p139 = pneg %p83
      %p140 = scmp.lt.s32.totalorder %s13, 2
      %s141 = scalar_select %p140, %s13, 2
      %s142 = scalar_lea.vmem %s2, %s141
      %p143 = scmp.lt.s32.totalorder %s13, 2
      %s144 = scalar_select %p143, %s13, 2
      %s145 = smul.addr %s144, 8
      %s146 = scalar_lea.vmem %s0, %s145
      %p147 = scmp.lt.s32.totalorder %s13, 2
      %s148 = scalar_select %p147, %s13, 2
      %s149 = smul.addr %s148, 8
      %s150 = scalar_lea.vmem %s1, %s149
      %p151 = scmp.lt.s32.totalorder %s13, 2
      %s152 = scalar_select %p151, %s13, 2
      %s153 = scalar_lea.vmem %s2, %s152
      %v154 = vld [vmem:[%s146] sm:$0xff]
      %v155 = vld [vmem:[%s150] sm:$0xff]
      %vm156 = vcmask 261120
      %v157 = vsel %vm156, %v154, -inf
      %158 = vmax.xlane.f32.xlu0 %v157
      %v159 = vpop.xlane.xlu0 %158
      %v160 = vsub.f32 %v154, %v159
      %v161 = vmul.f32 %v160, 1.442695
      %v162 = vpow.pop %v161
      %v163 = vsel %vm156, %v162, 0.0
      %164 = vadd.xlane.f32.xlu0 %v163
      %v165 = vpop.xlane.xlu0 %164
      %v166 = vlog2.pop %v165
      %v167 = vmul.f32 %v166, 0.6931472
      %v168 = vlaneseq
      %v169 = vand.u32 %v168, 127
      %170 = vset.pattern.permute.xlu0 0
      %171 = vperm.xlu0 %170, %v155
      %v172 = vpop.permute.xlu0 %171
      %vm173 = vcmp.eq.s32.totalorder %v169, %v172
      %v174 = vsel %vm173, 0.9, 0.0032258064
      %v175 = vmul.f32 %v174, %v154
      %v176 = vsel %vm156, %v175, 0.0
      %177 = vadd.xlane.f32.xlu0 %v176
      %v178 = vpop.xlane.xlu0 %177
      %v179 = vadd.f32 %v159, %v167
      %v180 = vsub.f32 %v179, %v178
      %p181 = scmp.eq.s32.totalorder %s13, 2
      %p182 = scmp.ne.s32.totalorder %s13, 2
      // Predicated region
      $region29: #{tpu_custom_call.1} parent=27 // pred_check
        %p183 = pneg %p182
      $region30: #{tpu_custom_call.1} parent=27 // pred_check_branch
        %185 = sbr.rel (%p183) target = $region32
      $region31: #{tpu_custom_call.1} parent=27 // pred_region
        %vm186 = vcmask 7168
        %v187 = vsel %vm186, %v180, 0.0
        %188 = vadd.xlane.f32.xlu0 %v187
        %v189 = vpop.xlane.xlu0 %188
        %v190 = vrot.slane %v189, 4
        %v191 = vadd.f32 %v189, %v190
        %v192 = vrot.slane %v191, 2
        %v193 = vadd.f32 %v191, %v192
        %v194 = vrot.slane %v193, 1
        %v195 = vadd.f32 %v193, %v194
        %s196 = vtos %v195
        %v197 = vstv %s196
        %vm198 = vcmask 0
        %199 = vst.msk [vmem:[%s153] sm:$0x1] %vm198, %v197
      $region32: #{tpu_custom_call.1} parent=27 // pred_fallthru
        _
      // Predicated region
      $region33: #{tpu_custom_call.1} parent=27 // pred_check
        %p200 = pneg %p181
      $region34: #{tpu_custom_call.1} parent=27 // pred_check_branch
        %202 = sbr.rel (%p200) target = $region36
      $region35: #{tpu_custom_call.1} parent=27 // pred_region
        %s203 = smul.u32 %s13, 8
        %v204 = vlaneseq
        %v205 = vshrl.u32 %v204, 7
        %v206 = vstv %s203
        %v207 = vadd.s32 %v206, %v205
        %vm208 = vcmp.lt.s32.totalorder %v207, 20
        %v209 = vsel %vm208, %v180, 0.0
        %vm210 = vcmask 7168
        %v211 = vsel %vm210, %v209, 0.0
        %212 = vadd.xlane.f32.xlu0 %v211
        %v213 = vpop.xlane.xlu0 %212
        %v214 = vrot.slane %v213, 4
        %v215 = vadd.f32 %v213, %v214
        %v216 = vrot.slane %v215, 2
        %v217 = vadd.f32 %v215, %v216
        %v218 = vrot.slane %v217, 1
        %v219 = vadd.f32 %v217, %v218
        %s220 = vtos %v219
        %v221 = vstv %s220
        %vm222 = vcmask 0
        %223 = vst.msk [vmem:[%s153] sm:$0x1] %vm222, %v221
      $region36: #{tpu_custom_call.1} parent=27 // pred_fallthru
        _
      %p224 = scmp.lt.s32.totalorder %s13, 2
      %s225 = scalar_select %p224, %s13, 2
      %s226 = scalar_lea.vmem %s2, %s225
      // Predicated region
      $region37: #{tpu_custom_call.1} parent=27 // pred_check
        %p227 = pneg %p83
      $region38: #{tpu_custom_call.1} parent=27 // pred_check_branch
        %229 = sbr.rel (%p227) target = $region40
      $region39: #{tpu_custom_call.1} parent=27 // pred_region
        _
      $region40: #{tpu_custom_call.1} parent=27 // pred_fallthru
        _
    $region28: #{tpu_custom_call.1} parent=5 // pred_fallthru
      _
    %p230 = scmp.le.s32.totalorder 2, %s8
    // Predicated region
    $region41: #{tpu_custom_call.1} parent=5 // pred_check
      %p231 = pneg %p230
    $region42: #{tpu_custom_call.1} parent=5 // pred_check_branch
      %233 = sbr.rel (%p231) target = $region44
    $region43: #{tpu_custom_call.1} parent=5 // pred_region
      %s234 = ssub.s32 %s8, 2
      // Predicated region
      $region45: #{tpu_custom_call.1} parent=43 // pred_check
        %p235 = pneg %p89
      $region46: #{tpu_custom_call.1} parent=43 // pred_check_branch
        %237 = sbr.rel (%p235) target = $region48
      $region47: #{tpu_custom_call.1} parent=43 // pred_region
        %p238 = scmp.lt.s32.totalorder %s14, 2
        %s239 = scalar_select %p238, %s14, 2
        %s240 = scalar_lea.vmem %s2, %s239
      $region48: #{tpu_custom_call.1} parent=43 // pred_fallthru
        _
    $region44: #{tpu_custom_call.1} parent=5 // pred_fallthru
      _
  $region6: #{tpu_custom_call.1} parent=0 // loop_footer
    %s12 = sadd.s32 1, %s8
  $region7: #{tpu_custom_call.1} parent=0 // loop_footer_branch
    %7 = sbr.rel target = $region3
  $region8: #{tpu_custom_call.1} parent=0 // loop_exit
    _

</llo_original>
